<compile_context>
chip_gen: v5e
topology: v5e:2x2
jax: 0.10.0
libtpu: 0.0.40
codegen_flags: <defaults>
</compile_context>

<pallas_src>
import numpy as np
import jax
import jax.numpy as jnp
from jax.experimental import pallas as pl
from jax.experimental.pallas import tpu as pltpu

_LANES = 128


def _build_kernel(w_np, b_np, img_w, mp):
    """Bake the (static) conv weights/bias into a Pallas kernel body.

    w_np : (Cout, Cin, KH, KW) numpy f32 -- compile-time constants of this model
    b_np : (Cout,)             numpy f32
    img_w: input image width W (lane offset of tap (ki,kj) is ki*W + kj)
    mp   : lane-padded flattened N*H*W extent (multiple of 128)

    Kernel signature: kernel(x_ref, o_ref)
      x_ref: VMEM (Cin, Mp) f32 -- input flattened (n,h,w) -> lanes, per channel
      o_ref: VMEM (Cout, Mp) f32 -- conv value at every flattened (n,i,j);
             only lanes with i<Ho, j<Wo are meaningful (wrapper trims), which
             keeps every in-kernel load/store lane-dense and unstrided.
    """
    cout, cin, kh, kw = (int(d) for d in w_np.shape)
    w64 = np.asarray(w_np, dtype=np.float64)
    b64 = np.asarray(b_np, dtype=np.float64)

    # Per output channel: (ci, lane_offset, weight) for NONZERO taps only
    # (default weights: 2 of 4 taps are zero and are skipped statically).
    rows = []
    for co in range(cout):
        taps = []
        for ci in range(cin):
            for ki in range(kh):
                for kj in range(kw):
                    wv = float(w64[co, ci, ki, kj])
                    if wv != 0.0:
                        taps.append((ci, ki * img_w + kj, wv))
        rows.append(tuple(taps))

    # Statically dedup identical channel rows (default model: all identical).
    uniq = {}
    chan_to_uid = []
    for row in rows:
        if row not in uniq:
            uniq[row] = len(uniq)
        chan_to_uid.append(uniq[row])
    uniq_rows = [r for r, _ in sorted(uniq.items(), key=lambda kv: kv[1])]

    same_row = all(u == 0 for u in chan_to_uid)
    same_bias = bool(np.all(b64 == b64[0]))
    fold_bias = same_row and same_bias  # fast path: one row + broadcast store

    def kernel(x_ref, o_ref):
        x = x_ref[...]  # one full-tile lane-dense load, (Cin, Mp)

        # Form each needed shifted tap exactly once (shared across channels).
        needed = sorted({(ci, off) for row in uniq_rows for (ci, off, _) in row})
        taps = {}
        for ci, off in needed:
            src = x[ci:ci + 1, :]            # static sublane slice, (1, Mp)
            # tap[p] = x[ci, p + off]  (XLU lane rotation; valid lanes never wrap)
            taps[(ci, off)] = src if off == 0 else pltpu.roll(src, mp - off, 1)

        def accumulate(row, init_bias):
            # init_bias is a python float folded into the FIRST term, e.g. the
            # default weights give (bias - tap_a) - tap_b: no negate, no mul,
            # no separate bias add.
            acc = None
            for ci, off, wv in row:
                t = taps[(ci, off)]
                if acc is None:
                    if wv == -1.0:
                        acc = jnp.float32(init_bias) - t
                    elif wv == 1.0:
                        acc = t if init_bias == 0.0 else t + jnp.float32(init_bias)
                    else:
                        acc = jnp.float32(wv) * t
                        if init_bias != 0.0:
                            acc = acc + jnp.float32(init_bias)
                else:
                    if wv == -1.0:
                        acc = acc - t
                    elif wv == 1.0:
                        acc = acc + t
                    else:
                        acc = acc + jnp.float32(wv) * t
            if acc is None:  # all-zero weight row
                acc = jnp.full((1, mp), jnp.float32(init_bias))
            return acc

        if fold_bias:
            row_out = accumulate(uniq_rows[0], float(b64[0]))
            # Single full-block lane-dense store for all output channels.
            o_ref[...] = jnp.broadcast_to(row_out, (cout, mp))
        else:
            accs = [accumulate(r, 0.0) for r in uniq_rows]
            for co in range(cout):
                row_out = accs[chan_to_uid[co]]
                if float(b64[co]) != 0.0:
                    row_out = row_out + jnp.float32(b64[co])
                o_ref[co:co + 1, :] = row_out

    return kernel


def make_basic_conv_forward(in_channels=1, out_channels=2, kernel_size=2,
                            weight_init=-1.0, bias_init=-2.0):
    """BasicConvTestModel forward with params baked as compile-time constants.

    Params are built with numpy (fill_conv_weight / fill_bias semantics), so
    the returned forward(x) contains no trace-time device_get and is
    jax.jit-friendly.
    """
    w_np = np.full((out_channels, in_channels, kernel_size, kernel_size),
                   weight_init, dtype=np.float32)
    w_np = w_np + np.eye(kernel_size, dtype=np.float32)   # fill_conv_weight
    b_np = np.full((out_channels,), bias_init, dtype=np.float32)

    def forward(x):
        x = jnp.asarray(x, jnp.float32)
        n, cin, h, w = x.shape
        assert cin == in_channels
        kh = kw = kernel_size
        ho, wo = h - kh + 1, w - kw + 1
        m = n * h * w
        mp = pl.cdiv(m, _LANES) * _LANES

        # Layout plumbing only (no duplicated im2col slab): per-channel
        # lane-dense flatten of (n,h,w), padded to a multiple of 128 lanes.
        x_flat = jnp.transpose(x, (1, 0, 2, 3)).reshape(cin, m)
        if mp != m:
            x_flat = jnp.pad(x_flat, ((0, 0), (0, mp - m)))

        kernel = _build_kernel(w_np, b_np, w, mp)
        out2d = pl.pallas_call(
            kernel,
            out_shape=jax.ShapeDtypeStruct((out_channels, mp), jnp.float32),
            in_specs=[pl.BlockSpec(memory_space=pltpu.MemorySpace.VMEM)],
            out_specs=pl.BlockSpec(memory_space=pltpu.MemorySpace.VMEM),
        )(x_flat)

        # Valid conv outputs live at flattened (n, i, j) with i < Ho, j < Wo.
        out = out2d[:, :m].reshape(out_channels, n, h, w)[:, :, :ho, :wo]
        return jnp.transpose(out, (1, 0, 2, 3))   # NCHW -> (N, Cout, Ho, Wo)

    return jax.jit(forward)


if __name__ == "__main__":
    key = jax.random.PRNGKey(0)
    # Module's INPUT_SIZE is [1,1,4,4]; use batch=2 with the same C/H/W.
    x = jax.random.normal(key, (2, 1, 4, 4), dtype=jnp.float32)

    forward = make_basic_conv_forward()   # defaults: 1->2, k=2, w_init=-1, b_init=-2
    out = jax.block_until_ready(forward(x))

    # Pure-JAX reference for correctness.
    w_ref = jnp.full((2, 1, 2, 2), -1.0, jnp.float32) + jnp.eye(2, dtype=jnp.float32)
    b_ref = jnp.full((2,), -2.0, jnp.float32)
    ref = jax.lax.conv_general_dilated(
        x, w_ref, window_strides=(1, 1), padding="VALID",
        dimension_numbers=("NCHW", "OIHW", "NCHW"),
    ) + b_ref[None, :, None, None]

    assert out.shape == (2, 2, 3, 3), out.shape
    assert jnp.allclose(out, ref, atol=1e-5, rtol=1e-5), (out, ref)
    print("KERNEL_OK")
</pallas_src>

<mosaic_0001>
module attributes {stable_mosaic.version = 11 : i64} {
  func.func @kernel(%arg0: memref<1x128xf32, #tpu.memory_space<vmem>>, %arg1: memref<2x128xf32, #tpu.memory_space<vmem>>) attributes {dimension_semantics = [], scalar_prefetch = 0 : i64, scratch_operands = 0 : i64, tpu.core_type = #tpu.core_type<tc>} {
    %c0 = arith.constant 0 : index
    %c0_0 = arith.constant 0 : index
    %0 = vector.load %arg0[%c0, %c0_0] : memref<1x128xf32, #tpu.memory_space<vmem>>, vector<1x128xf32>
    %c127_i32 = arith.constant 127 : i32
    %1 = tpu.dynamic_rotate %0 by %c127_i32 dim 1 : vector<1x128xf32>, i32 -> vector<1x128xf32>
    %c124_i32 = arith.constant 124 : i32
    %2 = tpu.dynamic_rotate %0 by %c124_i32 dim 1 : vector<1x128xf32>, i32 -> vector<1x128xf32>
    %cst = arith.constant -2.000000e+00 : f32
    %3 = vector.broadcast %cst : f32 to vector<1x128xf32>
    %4 = arith.subf %3, %1 : vector<1x128xf32>
    %5 = arith.subf %4, %2 : vector<1x128xf32>
    %6 = vector.shape_cast %5 : vector<1x128xf32> to vector<1x128xf32>
    %7 = vector.broadcast %6 : vector<1x128xf32> to vector<2x128xf32>
    %c0_1 = arith.constant 0 : index
    %c0_2 = arith.constant 0 : index
    %8 = vector.load %arg1[%c0_1, %c0_2] : memref<2x128xf32, #tpu.memory_space<vmem>>, vector<2x128xf32>
    tpu.vector_store %arg1[%c0_1, %c0_2], %7 {strides = array<i32>} : memref<2x128xf32, #tpu.memory_space<vmem>>, vector<2x128xf32>,
    return
  }
}

</mosaic_0001>

<llo_original>
// kernel: forward.1
$region0: #{forward.1}
  #allocation0 [shape = 'u32[]', space=smem, size = 0x4, offset = 0x4, fixed_abs, tag = 'smem constant byte address 0x4 - core index']
  #allocation1 [shape = 'u32[72,128]{1,0:T(1,128)}', space=vmem, size = 0x9000, scoped, tag = 'internal scratch']
  %s0 = inlined_call_operand.vmem [shape: f32[1,128], index: 0, kind: input, shape index: {}]
  %s1 = inlined_call_operand.vmem [shape: f32[2,128], index: 1, kind: output, shape index: {}]
  %s2 = sld [smem:[#allocation0]]
  $region14: #{forward.1} parent=0
    _
  %s4 = ssub.s32 1, %s2
  %s5 = scalar_select 0, %s4, %s2
  // Predicated region
  $region2: #{forward.1} parent=0 // pred_check
    _
  $region3: #{forward.1} parent=0 // pred_check_branch
    %7 = sbr.rel (0) target = $region5
  $region4: #{forward.1} parent=0 // pred_region
    _
  $region5: #{forward.1} parent=0 // pred_fallthru
    _
  %v8 = vld [vmem:[%s0] sm:$0x1]
  %9 = vrot.lane.b32.xlu0 %v8, 127
  %v10 = vpop.permute.xlu0 %9
  %11 = vrot.lane.b32.xlu0 %v8, 124
  %v12 = vpop.permute.xlu0 %11
  %v13 = vsub.f32 -2.0, %v10
  %v14 = vsub.f32 %v13, %v12
  %v15 = vperm.slane %v14, 0
  %16 = vst [vmem:[%s1] sm:$0x3] %v15
  // Predicated region
  $region6: #{forward.1} parent=0 // pred_check
    _
  $region7: #{forward.1} parent=0 // pred_check_branch
    %18 = sbr.rel (0) target = $region9
  $region8: #{forward.1} parent=0 // pred_region
    _
  $region9: #{forward.1} parent=0 // pred_fallthru
    _
  // Predicated region
  $region10: #{forward.1} parent=0 // pred_check
    _
  $region11: #{forward.1} parent=0 // pred_check_branch
    %20 = sbr.rel (0) target = $region13
  $region12: #{forward.1} parent=0 // pred_region
    _
  $region13: #{forward.1} parent=0 // pred_fallthru
    _

</llo_original>
